<compile_context>
chip_gen: v5e
topology: v5e:2x2
jax: 0.10.0
libtpu: 0.0.40
codegen_flags: <defaults>
</compile_context>

<pallas_src>
import jax
import jax.numpy as jnp
from jax.experimental import pallas as pl
from jax.experimental.pallas import tpu as pltpu


_LANES = 128                       # lane (minor) dim of the slab: dense vst
_SMALL_BYTES = 2 * 1024 * 1024     # below this, bypass pallas_call entirely


def _sublanes_for(dtype):
    """Minimum sublane granularity: 8 for f32, 16 for bf16, 32 for int8/fp8."""
    itemsize = jnp.dtype(dtype).itemsize
    return max(8, 32 // max(1, itemsize))


def _pick_block_bytes():
    """2 MiB on v5e (16 MiB default scoped VMEM), 4 MiB on v6e/v7x."""
    try:
        kind = jax.devices()[0].device_kind.lower()
    except Exception:
        kind = ""
    if "v6" in kind or "v7" in kind:
        return 4 * 1024 * 1024
    return 2 * 1024 * 1024


def _identity_copy_kernel(x_ref, o_ref):
    # Abstract forward placeholder: plain VMEM->VMEM copy (HBM-BW bound).
    o_ref[...] = x_ref[...]


def _identity_pallas(x, *, force_kernel=False):
    """Identity pass-through via a lane-dense, large-tile Pallas copy.

    force_kernel=True skips the small-tensor fast path (used by the test
    harness to guarantee the kernel itself compiles and runs on TPU).
    """
    orig_shape = x.shape
    total = 1
    for s in orig_shape:
        total *= int(s)
    if total == 0:
        return x

    itemsize = jnp.dtype(x.dtype).itemsize
    sublanes = _sublanes_for(x.dtype)

    # Fast path: for small tensors, launch + pipeline setup dominates by
    # orders of magnitude; the identity needs no work at all.
    if not force_kernel and total * itemsize < _SMALL_BYTES:
        return x

    # forward() is an identity: shapes that would require a pad + slice-back
    # (each a full extra HBM pass) are returned directly instead.
    if total % _LANES != 0:
        return x

    rows = total // _LANES
    block_bytes = _pick_block_bytes()
    row_bytes = _LANES * itemsize
    max_tile_rows = max(sublanes,
                        (block_bytes // row_bytes) // sublanes * sublanes)

    if rows % sublanes != 0:
        # Only a full-extent block is a legal BlockSpec here (block == array
        # dims).  Guard VMEM; otherwise just return the identity directly.
        if rows * row_bytes > 4 * block_bytes:
            return x
        tile_rows = rows
    else:
        tile_rows = min(rows, max_tile_rows)

    slab = x.reshape(rows, _LANES)
    grid = (pl.cdiv(rows, tile_rows),)   # ragged last block handled by Pallas

    out = pl.pallas_call(
        _identity_copy_kernel,
        out_shape=jax.ShapeDtypeStruct((rows, _LANES), slab.dtype),
        grid=grid,
        in_specs=[pl.BlockSpec((tile_rows, _LANES), lambda r: (r, 0))],
        out_specs=pl.BlockSpec((tile_rows, _LANES), lambda r: (r, 0)),
        compiler_params=pltpu.CompilerParams(
            dimension_semantics=("parallel",),   # megacore-shardable on v7x
            vmem_limit_bytes=32 * 1024 * 1024,   # explicit: safe on v5e/v6e/v7x
        ),
    )(slab)

    return out.reshape(orig_shape)


class BaseModelPallas:
    """JAX/Pallas counterpart of gnn_lib.models.base_model.BaseModel."""

    def __init__(self):
        # Abstract base class: no parameters.
        self.params = {}

    @classmethod
    def from_config(cls, atomic_types_mapper, config):
        return cls()

    def reset_parameters(self):
        # TODO(synk): abstract in BaseModel — nothing to reset (no parameters).
        pass

    def size(self):
        total_size = 0
        for p in jax.tree_util.tree_leaves(self.params):
            size = 1
            for s in p.shape:
                size *= s
            total_size += size
        return total_size

    def forward(self, data):
        # Concrete stand-in for the abstract forward: identity pass-through.
        return _identity_pallas(data)

    def __call__(self, data):
        return self.forward(data)


if __name__ == "__main__":
    key = jax.random.PRNGKey(0)
    # Small NCHW-style synthetic input consistent with a graph/feature tensor.
    x = jax.random.normal(key, (2, 4, 16, 16), dtype=jnp.float32)

    model = BaseModelPallas.from_config(atomic_types_mapper={"H": 0, "C": 1},
                                        config={})

    # Normal forward (takes the small-tensor fast path).
    y = jax.block_until_ready(model(x))
    assert y.shape == x.shape and y.dtype == x.dtype
    assert bool(jnp.allclose(y, x)), "identity forward mismatch (fast path)"

    # Force the Pallas kernel path so the kernel itself compiles and runs.
    y_k = jax.block_until_ready(_identity_pallas(x, force_kernel=True))
    assert y_k.shape == x.shape and y_k.dtype == x.dtype
    assert bool(jnp.allclose(y_k, x)), "identity forward mismatch (pallas f32)"

    # Exercise the dtype-aware (bf16 -> 16-sublane) block rounding as well.
    x_bf16 = x.astype(jnp.bfloat16)
    y_bf16 = jax.block_until_ready(_identity_pallas(x_bf16, force_kernel=True))
    assert y_bf16.shape == x_bf16.shape and y_bf16.dtype == x_bf16.dtype
    assert bool(jnp.all(y_bf16 == x_bf16)), "identity forward mismatch (bf16)"

    assert model.size() == 0, "BaseModel defines no parameters"

    print("KERNEL_OK")
</pallas_src>

<mosaic_0001>
module attributes {stable_mosaic.version = 11 : i64} {
  func.func @_identity_copy_kernel(%arg0: i32, %arg1: memref<16x128xf32, #tpu.memory_space<vmem>>, %arg2: memref<16x128xf32, #tpu.memory_space<vmem>>) attributes {dimension_semantics = [#tpu.dimension_semantics<parallel>], iteration_bounds = array<i64: 1>, scalar_prefetch = 0 : i64, scratch_operands = 0 : i64, tpu.core_type = #tpu.core_type<tc>, window_params = [{transform_indices = @transform_0, window_bounds = array<i64: 16, 128>}, {transform_indices = @transform_1, window_bounds = array<i64: 16, 128>}]} {
    %c0 = arith.constant 0 : index
    %c0_0 = arith.constant 0 : index
    %0 = vector.load %arg1[%c0, %c0_0] : memref<16x128xf32, #tpu.memory_space<vmem>>, vector<16x128xf32>
    %c0_1 = arith.constant 0 : index
    %c0_2 = arith.constant 0 : index
    %1 = vector.load %arg2[%c0_1, %c0_2] : memref<16x128xf32, #tpu.memory_space<vmem>>, vector<16x128xf32>
    tpu.vector_store %arg2[%c0_1, %c0_2], %0 {strides = array<i32>} : memref<16x128xf32, #tpu.memory_space<vmem>>, vector<16x128xf32>,
    return
  }
  func.func @transform_0(%arg0: i32) -> (i32, i32) {
    %c0_i32 = arith.constant 0 : i32
    %c0_i32_0 = arith.constant 0 : i32
    return %arg0, %c0_i32 : i32, i32
  }
  func.func @transform_1(%arg0: i32) -> (i32, i32) {
    %c0_i32 = arith.constant 0 : i32
    %c0_i32_0 = arith.constant 0 : i32
    return %arg0, %c0_i32 : i32, i32
  }
}

</mosaic_0001>

<llo_original>
// kernel: tpu_custom_call.1
$region0: #{tpu_custom_call.1}
  #allocation0 [shape = 'u32[]', space=smem, size = 0x4, offset = 0x4, fixed_abs, tag = 'smem constant byte address 0x4 - core index']
  #allocation1 [shape = 'u32[72,128]{1,0:T(1,128)}', space=vmem, size = 0x9000, scoped, tag = 'internal scratch']
  %s0 = inlined_call_operand.hbm [shape: f32[16,128], index: 0, kind: input, shape index: {}]
  %s1 = inlined_call_operand.hbm [shape: f32[16,128], index: 1, kind: output, shape index: {}]
  %s2 = sld [smem:[#allocation0]]
  $region18: #{tpu_custom_call.1} parent=0
    _
  %s4 = ssub.s32 1, %s2
  %s5 = scalar_select 0, %s4, %s2
  $region1: #{tpu_custom_call.1} parent=0
    #allocation2 [shape = 'u8[8192]{0}', space=vmem, size = 0x2000, scoped, tag = 'input window, operand 0, single buffered']
    #allocation3 [shape = 's32[1]{0}', space=sflag, size = 0x4, scoped, tag = 'scoped memory for tpu_custom_call.1']
    #allocation4 [shape = 's32[1]{0}', space=sflag, size = 0x4, scoped, tag = 'scoped memory for tpu_custom_call.1']
    #allocation5 [shape = 'u8[8192]{0}', space=vmem, size = 0x2000, scoped, tag = 'output window, operand 0, single buffered']
    %6 = vsyncpa [#allocation3], 0
    %7 = vsyncpa [#allocation4], 0
    // Predicated region
    $region2: #{tpu_custom_call.1} parent=1 // pred_check
      _
    $region3: #{tpu_custom_call.1} parent=1 // pred_check_branch
      %9 = sbr.rel (0) target = $region5
    $region4: #{tpu_custom_call.1} parent=1 // pred_region
      %11 = vsyncadd [#allocation3], 0
      %s12 = sshll.u32 %s0, 4
      %s13 = int_to_ptr.hbm [resolvable:$true] %s12
      %s14 = sshll.u32 [#allocation2], 4
      %s15 = int_to_ptr.vmem [resolvable:$true] %s14
      %20 = dma.hbm_to_vmem [thread:$0]  %s13, 256, %s15, [#allocation3], 128, 128, 8
    $region5: #{tpu_custom_call.1} parent=1 // pred_fallthru
      _
    // Predicated region
    $region6: #{tpu_custom_call.1} parent=1 // pred_check
      _
    $region7: #{tpu_custom_call.1} parent=1 // pred_check_branch
      %22 = sbr.rel (0) target = $region9
    $region8: #{tpu_custom_call.1} parent=1 // pred_region
      %24 = dma.done [#allocation3], 256
    $region9: #{tpu_custom_call.1} parent=1 // pred_fallthru
      _
    %v25 = vld [vmem:[#allocation2] sm:$0xff]
    %v26 = vld [vmem:[#allocation2 + $0x8] sm:$0xff]
    %27 = vst [vmem:[#allocation5] sm:$0xff] %v25
    %28 = vst [vmem:[#allocation5 + $0x8] sm:$0xff] %v26
    // Predicated region
    $region10: #{tpu_custom_call.1} parent=1 // pred_check
      _
    $region11: #{tpu_custom_call.1} parent=1 // pred_check_branch
      %30 = sbr.rel (0) target = $region13
    $region12: #{tpu_custom_call.1} parent=1 // pred_region
      %32 = vsyncadd [#allocation4], 0
      %s33 = sshll.u32 [#allocation5], 4
      %s34 = int_to_ptr.vmem [resolvable:$true] %s33
      %s35 = sshll.u32 %s1, 4
      %s36 = int_to_ptr.hbm [resolvable:$true] %s35
      %41 = dma.vmem_to_hbm [thread:$0]  %s34, 256, %s36, [#allocation4], 128, 128, 8
    $region13: #{tpu_custom_call.1} parent=1 // pred_fallthru
      _
    // Predicated region
    $region14: #{tpu_custom_call.1} parent=1 // pred_check
      _
    $region15: #{tpu_custom_call.1} parent=1 // pred_check_branch
      %43 = sbr.rel (0) target = $region17
    $region16: #{tpu_custom_call.1} parent=1 // pred_region
      %45 = dma.done [#allocation4], 256
    $region17: #{tpu_custom_call.1} parent=1 // pred_fallthru
      _
    %46 = vsyncpa [#allocation3], 1
    %47 = vsyncpa [#allocation4], 1

</llo_original>
